<compile_context>
chip_gen: v7x
topology: tpu7x:2x2x1
jax: 0.10.0
libtpu: 0.0.40
codegen_flags: <defaults>
</compile_context>

<pallas_src>
import functools

import jax
import jax.numpy as jnp
from jax import lax
from jax.experimental import pallas as pl
from jax.experimental.pallas import tpu as pltpu


def _focal_loss_kernel(x_ref, t_ref, out_ref, *, gamma, n_total, tile_n,
                       chunks_per_partial):
    p = pl.program_id(0)       # partial-accumulator ("parallel") axis
    j = pl.program_id(1)       # sequential chunk axis (reduction)

    @pl.when(j == 0)
    def _():
        out_ref[...] = jnp.zeros_like(out_ref)

    x = x_ref[...].astype(jnp.float32)           # (TN, C)
    t = t_ref[...]                               # (TN, 1) int32
    tn, c = x.shape

    # Row-wise log-softmax statistics. The exp over classes is required for the
    # denominator; everything after this point is per-row (TN, 1) work only.
    m = jnp.max(x, axis=1, keepdims=True)                                # (TN,1)
    lse = jnp.log(jnp.sum(jnp.exp(x - m), axis=1, keepdims=True))        # (TN,1)

    # Gather x[n, target[n]] with a one-hot select + row reduce.
    col = lax.broadcasted_iota(jnp.int32, (tn, c), 1)
    x_t = jnp.sum(jnp.where(col == t, x, 0.0), axis=1, keepdims=True)    # (TN,1)

    logpt_t = x_t - m - lse                                              # (TN,1)
    pt_t = jnp.exp(logpt_t)                                              # (TN,1)
    one_minus = 1.0 - pt_t
    if float(gamma) == int(gamma):
        w = lax.integer_pow(one_minus, int(gamma))   # gamma=2 -> one VPU multiply
    else:
        w = jnp.power(one_minus, jnp.float32(gamma))
    mod_t = w * logpt_t                                                  # (TN,1)

    # Mask rows past the true N (tail tile and/or clamped padding chunks).
    chunk = p * chunks_per_partial + j
    row0 = chunk * tile_n
    rows = row0 + lax.broadcasted_iota(jnp.int32, (tn, 1), 0)
    contrib = jnp.where(rows < n_total, mod_t, 0.0)

    out_ref[...] += jnp.sum(contrib).reshape(out_ref.shape)


def _choose_tile_n(n, c):
    # Size the double-buffered logits stream to stay well inside the most
    # conservative scoped-VMEM default (16 MiB on v5e, 32 MiB on v6e/v7x),
    # leaving headroom for the in-kernel f32 temporaries.
    budget_bytes = 8 * 1024 * 1024
    bytes_per_row = 2 * max(int(c), 1) * 4          # 2 pipeline buffers, f32
    max_rows = max(8, budget_bytes // bytes_per_row)
    tile = min(int(n), 1024, int(max_rows))
    tile = max(8, (tile // 8) * 8)                  # sublane-aligned
    return tile


def focal_loss(inp, target, gamma=2, tile_n=None):
    """inp: [N, C] float, target: [N] int -> scalar f32 mean focal loss."""
    n, c = inp.shape
    if tile_n is None:
        tile_n = _choose_tile_n(n, c)
    t2d = target.astype(jnp.int32).reshape(n, 1)

    n_chunks = -(-n // tile_n)                      # cdiv
    num_partials = 2 if n_chunks >= 2 else 1        # v7x: one accumulator per TC
    chunks_per_partial = -(-n_chunks // num_partials)

    def _chunk_idx(p, j):
        # Clamp so padding grid steps re-read the last real chunk; their rows
        # fall past n_total and are fully masked in the kernel (contribute 0).
        return jnp.minimum(p * chunks_per_partial + j, n_chunks - 1)

    kernel = functools.partial(
        _focal_loss_kernel, gamma=gamma, n_total=n, tile_n=tile_n,
        chunks_per_partial=chunks_per_partial)

    partials = pl.pallas_call(
        kernel,
        out_shape=jax.ShapeDtypeStruct((num_partials, 1, 1), jnp.float32),
        grid_spec=pltpu.PrefetchScalarGridSpec(
            num_scalar_prefetch=0,
            grid=(num_partials, chunks_per_partial),
            in_specs=[
                pl.BlockSpec((tile_n, c), lambda p, j: (_chunk_idx(p, j), 0)),
                pl.BlockSpec((tile_n, 1), lambda p, j: (_chunk_idx(p, j), 0)),
            ],
            out_specs=pl.BlockSpec((1, 1, 1), lambda p, j: (p, 0, 0)),
        ),
        compiler_params=pltpu.CompilerParams(
            dimension_semantics=("parallel", "arbitrary"),
        ),
    )(inp, t2d)

    # TODO(synk): per-class `weight` (weighted nll_loss mean) not implemented;
    # the module default is weight=None.
    # TODO(synk): for C << 128 the lane axis is underutilized; packing multiple
    # rows per 128-lane vreg group is not implemented.
    return -jnp.sum(partials) / jnp.float32(n)


def _reference_focal_loss(inp, target, gamma=2):
    logpt = jax.nn.log_softmax(inp.astype(jnp.float32), axis=1)
    pt = jnp.exp(logpt)
    mod = (1.0 - pt) ** gamma * logpt
    gathered = jnp.take_along_axis(mod, target[:, None].astype(jnp.int32), axis=1)[:, 0]
    return -jnp.mean(gathered)


if __name__ == "__main__":
    key = jax.random.PRNGKey(0)
    k1, k2, k3, k4 = jax.random.split(key, 4)

    # Case 1: shapes matching the module docstring ([N, C] logits, [N] targets).
    N, C = 64, 10
    logits = jax.random.normal(k1, (N, C), dtype=jnp.float32)
    targets = jax.random.randint(k2, (N,), 0, C, dtype=jnp.int32)
    loss = focal_loss(logits, targets, gamma=2)
    jax.block_until_ready(loss)
    ref = _reference_focal_loss(logits, targets, gamma=2)
    assert jnp.allclose(loss, ref, rtol=1e-5, atol=1e-5), (loss, ref)

    # Case 2: ragged N (tail-tile masking), multi-chunk grid, the leading
    # "parallel" partial axis, and chunk-index clamping all exercised.
    N2, C2 = 200, 37
    logits2 = jax.random.normal(k3, (N2, C2), dtype=jnp.float32)
    targets2 = jax.random.randint(k4, (N2,), 0, C2, dtype=jnp.int32)
    loss2 = focal_loss(logits2, targets2, gamma=2, tile_n=48)
    jax.block_until_ready(loss2)
    ref2 = _reference_focal_loss(logits2, targets2, gamma=2)
    assert jnp.allclose(loss2, ref2, rtol=1e-5, atol=1e-5), (loss2, ref2)

    print("KERNEL_OK")
</pallas_src>

<mosaic_0001>
module attributes {stable_mosaic.version = 11 : i64} {
  func.func @_focal_loss_kernel(%arg0: i32, %arg1: i32, %arg2: memref<64x10xf32, #tpu.memory_space<vmem>>, %arg3: memref<64x1xi32, #tpu.memory_space<vmem>>, %arg4: memref<1x1x1xf32, #tpu.memory_space<vmem>>) attributes {dimension_semantics = [#tpu.dimension_semantics<parallel>, #tpu.dimension_semantics<arbitrary>], iteration_bounds = array<i64: 1, 1>, scalar_prefetch = 0 : i64, scratch_operands = 0 : i64, tpu.core_type = #tpu.core_type<tc>, window_params = [{transform_indices = @transform_0, window_bounds = array<i64: 64, 10>}, {transform_indices = @transform_1, window_bounds = array<i64: 64, 1>}, {transform_indices = @transform_2, window_bounds = array<i64: 1, 1, 1>}]} {
    %c0_i32 = arith.constant 0 : i32
    %0 = arith.cmpi eq, %arg1, %c0_i32 : i32
    %1 = arith.extui %0 : i1 to i32
    %c0_i32_0 = arith.constant 0 : i32
    %2 = arith.cmpi ne, %1, %c0_i32_0 : i32
    scf.if %2 {
      %cst_17 = arith.constant 0.000000e+00 : f32
      %45 = vector.broadcast %cst_17 : f32 to vector<1x1x1xf32>
      %c0_18 = arith.constant 0 : index
      %c0_19 = arith.constant 0 : index
      %c0_20 = arith.constant 0 : index
      %46 = vector.load %arg4[%c0_18, %c0_19, %c0_20] : memref<1x1x1xf32, #tpu.memory_space<vmem>>, vector<1x1x1xf32>
      tpu.vector_store %arg4[%c0_18, %c0_19, %c0_20], %45 {strides = array<i32>} : memref<1x1x1xf32, #tpu.memory_space<vmem>>, vector<1x1x1xf32>,
    } else {
    }
    %c0 = arith.constant 0 : index
    %c0_1 = arith.constant 0 : index
    %3 = vector.load %arg2[%c0, %c0_1] : memref<64x10xf32, #tpu.memory_space<vmem>>, vector<64x10xf32>
    %c0_2 = arith.constant 0 : index
    %c0_3 = arith.constant 0 : index
    %4 = vector.load %arg3[%c0_2, %c0_3] : memref<64x1xi32, #tpu.memory_space<vmem>>, vector<64x1xi32>
    %cst = arith.constant dense<0xFF800000> : vector<64xf32>
    %5 = vector.multi_reduction <maximumf>, %3, %cst [1] : vector<64x10xf32> to vector<64xf32>
    %6 = vector.shape_cast %5 : vector<64xf32> to vector<64x1xf32>
    %7 = vector.broadcast %6 : vector<64x1xf32> to vector<64x10xf32>
    %8 = arith.subf %3, %7 : vector<64x10xf32>
    %9 = math.exp %8 : vector<64x10xf32>
    %cst_4 = arith.constant dense<0.000000e+00> : vector<64xf32>
    %10 = vector.multi_reduction <add>, %9, %cst_4 [1] : vector<64x10xf32> to vector<64xf32>
    %11 = vector.shape_cast %10 : vector<64xf32> to vector<64x1xf32>
    %12 = math.log %11 : vector<64x1xf32>
    %13 = tpu.iota {dimensions = array<i32: 1>} : vector<64x10xi32>
    %14 = vector.broadcast %4 : vector<64x1xi32> to vector<64x10xi32>
    %15 = arith.cmpi eq, %13, %14 : vector<64x10xi32>
    %cst_5 = arith.constant 0.000000e+00 : f32
    %16 = vector.broadcast %cst_5 : f32 to vector<64x10xf32>
    %17 = arith.select %15, %3, %16 : vector<64x10xi1>, vector<64x10xf32>
    %cst_6 = arith.constant dense<0.000000e+00> : vector<64xf32>
    %18 = vector.multi_reduction <add>, %17, %cst_6 [1] : vector<64x10xf32> to vector<64xf32>
    %19 = vector.shape_cast %18 : vector<64xf32> to vector<64x1xf32>
    %20 = arith.subf %19, %6 : vector<64x1xf32>
    %21 = arith.subf %20, %12 : vector<64x1xf32>
    %22 = math.exp %21 : vector<64x1xf32>
    %cst_7 = arith.constant 1.000000e+00 : f32
    %23 = vector.broadcast %cst_7 : f32 to vector<64x1xf32>
    %24 = arith.subf %23, %22 : vector<64x1xf32>
    %25 = arith.mulf %24, %24 : vector<64x1xf32>
    %26 = arith.mulf %25, %21 : vector<64x1xf32>
    %c1_i32 = arith.constant 1 : i32
    %27 = arith.muli %arg0, %c1_i32 : i32
    %28 = arith.addi %27, %arg1 : i32
    %c64_i32 = arith.constant 64 : i32
    %29 = arith.muli %28, %c64_i32 : i32
    %30 = tpu.iota {dimensions = array<i32: 0>} : vector<64x1xi32>
    %31 = vector.broadcast %29 : i32 to vector<64x1xi32>
    %32 = arith.addi %31, %30 : vector<64x1xi32>
    %c64_i32_8 = arith.constant 64 : i32
    %33 = vector.broadcast %c64_i32_8 : i32 to vector<64x1xi32>
    %34 = arith.cmpi slt, %32, %33 : vector<64x1xi32>
    %cst_9 = arith.constant 0.000000e+00 : f32
    %35 = vector.broadcast %cst_9 : f32 to vector<64x1xf32>
    %36 = arith.select %34, %26, %35 : vector<64x1xi1>, vector<64x1xf32>
    %c0_10 = arith.constant 0 : index
    %c0_11 = arith.constant 0 : index
    %c0_12 = arith.constant 0 : index
    %37 = vector.load %arg4[%c0_10, %c0_11, %c0_12] : memref<1x1x1xf32, #tpu.memory_space<vmem>>, vector<1x1x1xf32>
    %38 = vector.shape_cast %36 : vector<64x1xf32> to vector<1x64x1xf32>
    %cst_13 = arith.constant dense<0.000000e+00> : vector<1xf32>
    %39 = vector.multi_reduction <add>, %38, %cst_13 [1, 2] : vector<1x64x1xf32> to vector<1xf32>
    %40 = vector.shape_cast %39 : vector<1xf32> to vector<1x1x1xf32>
    %41 = vector.extract %40[0, 0, 0] : f32 from vector<1x1x1xf32>
    %42 = vector.broadcast %41 : f32 to vector<1x1x1xf32>
    %43 = arith.addf %37, %42 : vector<1x1x1xf32>
    %c0_14 = arith.constant 0 : index
    %c0_15 = arith.constant 0 : index
    %c0_16 = arith.constant 0 : index
    %44 = vector.load %arg4[%c0_14, %c0_15, %c0_16] : memref<1x1x1xf32, #tpu.memory_space<vmem>>, vector<1x1x1xf32>
    tpu.vector_store %arg4[%c0_14, %c0_15, %c0_16], %43 {strides = array<i32>} : memref<1x1x1xf32, #tpu.memory_space<vmem>>, vector<1x1x1xf32>,
    return
  }
  func.func @transform_0(%arg0: i32, %arg1: i32) -> (i32, i32) {
    %c1_i32 = arith.constant 1 : i32
    %0 = arith.muli %arg0, %c1_i32 : i32
    %1 = arith.addi %0, %arg1 : i32
    %c0_i32 = arith.constant 0 : i32
    %2 = arith.minsi %1, %c0_i32 : i32
    %c0_i32_0 = arith.constant 0 : i32
    %c0_i32_1 = arith.constant 0 : i32
    return %2, %c0_i32_0 : i32, i32
  }
  func.func @transform_1(%arg0: i32, %arg1: i32) -> (i32, i32) {
    %c1_i32 = arith.constant 1 : i32
    %0 = arith.muli %arg0, %c1_i32 : i32
    %1 = arith.addi %0, %arg1 : i32
    %c0_i32 = arith.constant 0 : i32
    %2 = arith.minsi %1, %c0_i32 : i32
    %c0_i32_0 = arith.constant 0 : i32
    %c0_i32_1 = arith.constant 0 : i32
    return %2, %c0_i32_0 : i32, i32
  }
  func.func @transform_2(%arg0: i32, %arg1: i32) -> (i32, i32, i32) {
    %c0_i32 = arith.constant 0 : i32
    %c0_i32_0 = arith.constant 0 : i32
    %c0_i32_1 = arith.constant 0 : i32
    return %arg0, %c0_i32, %c0_i32_0 : i32, i32, i32
  }
}

</mosaic_0001>

<llo_original>
// kernel: tpu_custom_call.1
$region0: #{tpu_custom_call.1}
  #allocation0 [shape = 'u32[]', space=smem, size = 0x4, offset = 0x4, fixed_abs, tag = 'smem constant byte address 0x4 - core index']
  #allocation1 [shape = 'u32[144,128]{1,0:T(1,128)}', space=vmem, size = 0x12000, scoped, tag = 'internal scratch']
  %s0 = inlined_call_operand.vmem [shape: f32[64,10], index: 0, kind: input, shape index: {}]
  %s1 = inlined_call_operand.vmem [shape: s32[64,1], index: 1, kind: input, shape index: {}]
  %s2 = inlined_call_operand.hbm [shape: f32[1,1,1], index: 2, kind: output, shape index: {}]
  %s3 = sld [smem:[#allocation0]]
  $region22: #{tpu_custom_call.1} parent=0
    _
  %s5 = ssub.s32 1, %s3
  %s6 = scalar_select 0, %s5, %s3
  $region1: #{tpu_custom_call.1} parent=0
    #allocation2 [shape = 'u8[512]{0}', space=vmem, size = 0x400, scoped, tag = 'output window, operand 0, single buffered']
    #allocation3 [shape = 's32[1]{0}', space=sflag, size = 0x4, scoped, tag = 'scoped memory for tpu_custom_call.1']
    %7 = vsyncpa [#allocation3], 0
    // Predicated region
    $region2: #{tpu_custom_call.1} parent=1 // pred_check
      _
    $region3: #{tpu_custom_call.1} parent=1 // pred_check_branch
      %9 = sbr.rel (0) target = $region5
    $region4: #{tpu_custom_call.1} parent=1 // pred_region
      %s10 = sadd.s32 0, 0
      %p11 = scmp.lt.s32.totalorder %s10, 0
      %s12 = scalar_select %p11, %s10, 0
      %s13 = smul.u32 8, %s12
      %p14 = scmp.lt.s32.totalorder %s13, 7
      %s15 = scalar_select %p14, %s13, 7
      %s16 = smul.addr %s15, 8
      %s17 = scalar_lea.vmem %s0, %s16
      %s18 = sadd.s32 0, 0
      %p19 = scmp.lt.s32.totalorder %s18, 0
      %s20 = scalar_select %p19, %s18, 0
      %s21 = smul.u32 8, %s20
    $region5: #{tpu_custom_call.1} parent=1 // pred_fallthru
      _
    // Predicated region
    $region6: #{tpu_custom_call.1} parent=1 // pred_check
      _
    $region7: #{tpu_custom_call.1} parent=1 // pred_check_branch
      %23 = sbr.rel (0) target = $region9
    $region8: #{tpu_custom_call.1} parent=1 // pred_region
      %s24 = sadd.s32 0, 0
      %p25 = scmp.lt.s32.totalorder %s24, 0
      %s26 = scalar_select %p25, %s24, 0
      %s27 = smul.u32 8, %s26
      %p28 = scmp.lt.s32.totalorder %s27, 7
      %s29 = scalar_select %p28, %s27, 7
      %s30 = smul.addr %s29, 8
      %s31 = scalar_lea.vmem %s1, %s30
      %s32 = sadd.s32 0, 0
      %p33 = scmp.lt.s32.totalorder %s32, 0
      %s34 = scalar_select %p33, %s32, 0
      %s35 = smul.u32 8, %s34
    $region9: #{tpu_custom_call.1} parent=1 // pred_fallthru
      _
    %s36 = sadd.s32 0, 0
    %p37 = scmp.lt.s32.totalorder %s36, 0
    %s38 = scalar_select %p37, %s36, 0
    %s39 = smul.u32 8, %s38
    %p40 = scmp.lt.s32.totalorder %s39, 7
    %s41 = scalar_select %p40, %s39, 7
    %s42 = smul.addr %s41, 8
    %s43 = scalar_lea.vmem %s0, %s42
    %s44 = sadd.s32 0, 0
    %p45 = scmp.lt.s32.totalorder %s44, 0
    %s46 = scalar_select %p45, %s44, 0
    %s47 = smul.u32 8, %s46
    %p48 = scmp.lt.s32.totalorder %s47, 7
    %s49 = scalar_select %p48, %s47, 7
    %s50 = smul.addr %s49, 8
    %s51 = scalar_lea.vmem %s1, %s50
    %s52 = sadd.s32 0, 0
    %p53 = scmp.lt.s32.totalorder %s52, 0
    %s54 = scalar_select %p53, %s52, 0
    %s55 = smul.u32 8, %s54
    %p56 = scmp.lt.s32.totalorder %s55, 7
    %s57 = scalar_select %p56, %s55, 7
    %s58 = smul.addr %s57, 8
    %s59 = scalar_lea.vmem %s0, %s58
    %s60 = sadd.s32 0, 0
    %p61 = scmp.lt.s32.totalorder %s60, 0
    %s62 = scalar_select %p61, %s60, 0
    %s63 = smul.u32 8, %s62
    %s64 = sadd.s32 0, 0
    %p65 = scmp.lt.s32.totalorder %s64, 0
    %s66 = scalar_select %p65, %s64, 0
    %s67 = smul.u32 8, %s66
    %p68 = scmp.lt.s32.totalorder %s67, 7
    %s69 = scalar_select %p68, %s67, 7
    %s70 = smul.addr %s69, 8
    %s71 = scalar_lea.vmem %s1, %s70
    %s72 = sadd.s32 0, 0
    %p73 = scmp.lt.s32.totalorder %s72, 0
    %s74 = scalar_select %p73, %s72, 0
    %s75 = smul.u32 8, %s74
    %p76 = scmp.eq.s32.totalorder 0, 0
    // Predicated region
    $region10: #{tpu_custom_call.1} parent=1 // pred_check
      %p77 = pneg %p76
    $region11: #{tpu_custom_call.1} parent=1 // pred_check_branch
      %79 = sbr.rel (%p77) target = $region13
    $region12: #{tpu_custom_call.1} parent=1 // pred_region
      %vm80 = vcmask 0
      %81 = vst.msk [vmem:[#allocation2] sm:$0x1] %vm80, 0.0
    $region13: #{tpu_custom_call.1} parent=1 // pred_fallthru
      _
    %v82 = vld [vmem:[%s59] sm:$0xff]
    %v83 = vld [vmem:[%s59 + $0x8] sm:$0xff]
    %v84 = vld [vmem:[%s59 + $0x10] sm:$0xff]
    %v85 = vld [vmem:[%s59 + $0x18] sm:$0xff]
    %v86 = vld [vmem:[%s59 + $0x20] sm:$0xff]
    %v87 = vld [vmem:[%s59 + $0x28] sm:$0xff]
    %v88 = vld [vmem:[%s59 + $0x30] sm:$0xff]
    %v89 = vld [vmem:[%s59 + $0x38] sm:$0xff]
    %v90 = vld [vmem:[%s71] sm:$0xff]
    %v91 = vld [vmem:[%s71 + $0x8] sm:$0xff]
    %v92 = vld [vmem:[%s71 + $0x10] sm:$0xff]
    %v93 = vld [vmem:[%s71 + $0x18] sm:$0xff]
    %v94 = vld [vmem:[%s71 + $0x20] sm:$0xff]
    %v95 = vld [vmem:[%s71 + $0x28] sm:$0xff]
    %v96 = vld [vmem:[%s71 + $0x30] sm:$0xff]
    %v97 = vld [vmem:[%s71 + $0x38] sm:$0xff]
    %vm98 = vcmask 80896
    %v99 = vsel %vm98, %v82, -inf
    %100 = vmax.xlane.f32.xlu0 %v99
    %v101 = vpop.xlane.xlu0 %100
    %v102 = vsel %vm98, %v83, -inf
    %103 = vmax.xlane.f32.xlu0 %v102
    %v104 = vpop.xlane.xlu0 %103
    %v105 = vsel %vm98, %v84, -inf
    %106 = vmax.xlane.f32.xlu0 %v105
    %v107 = vpop.xlane.xlu0 %106
    %v108 = vsel %vm98, %v85, -inf
    %109 = vmax.xlane.f32.xlu0 %v108
    %v110 = vpop.xlane.xlu0 %109
    %v111 = vsel %vm98, %v86, -inf
    %112 = vmax.xlane.f32.xlu0 %v111
    %v113 = vpop.xlane.xlu0 %112
    %v114 = vsel %vm98, %v87, -inf
    %115 = vmax.xlane.f32.xlu0 %v114
    %v116 = vpop.xlane.xlu0 %115
    %v117 = vsel %vm98, %v88, -inf
    %118 = vmax.xlane.f32.xlu0 %v117
    %v119 = vpop.xlane.xlu0 %118
    %v120 = vsel %vm98, %v89, -inf
    %121 = vmax.xlane.f32.xlu0 %v120
    %v122 = vpop.xlane.xlu0 %121
    %v123 = vsub.f32 %v82, %v101
    %v124 = vsub.f32 %v83, %v104
    %v125 = vsub.f32 %v84, %v107
    %v126 = vsub.f32 %v85, %v110
    %v127 = vsub.f32 %v86, %v113
    %v128 = vsub.f32 %v87, %v116
    %v129 = vsub.f32 %v88, %v119
    %v130 = vsub.f32 %v89, %v122
    %v131 = vmul.f32 %v123, 1.442695
    %v132 = vpow.pop %v131
    %v133 = vmul.f32 %v124, 1.442695
    %v134 = vpow.pop %v133
    %v135 = vmul.f32 %v125, 1.442695
    %v136 = vpow.pop %v135
    %v137 = vmul.f32 %v126, 1.442695
    %v138 = vpow.pop %v137
    %v139 = vmul.f32 %v127, 1.442695
    %v140 = vpow.pop %v139
    %v141 = vmul.f32 %v128, 1.442695
    %v142 = vpow.pop %v141
    %v143 = vmul.f32 %v129, 1.442695
    %v144 = vpow.pop %v143
    %v145 = vmul.f32 %v130, 1.442695
    %v146 = vpow.pop %v145
    %v147 = vsel %vm98, %v132, 0.0
    %148 = vadd.xlane.f32.xlu0 %v147
    %v149 = vpop.xlane.xlu0 %148
    %v150 = vsel %vm98, %v134, 0.0
    %151 = vadd.xlane.f32.xlu0 %v150
    %v152 = vpop.xlane.xlu0 %151
    %v153 = vsel %vm98, %v136, 0.0
    %154 = vadd.xlane.f32.xlu0 %v153
    %v155 = vpop.xlane.xlu0 %154
    %v156 = vsel %vm98, %v138, 0.0
    %157 = vadd.xlane.f32.xlu0 %v156
    %v158 = vpop.xlane.xlu0 %157
    %v159 = vsel %vm98, %v140, 0.0
    %160 = vadd.xlane.f32.xlu0 %v159
    %v161 = vpop.xlane.xlu0 %160
    %v162 = vsel %vm98, %v142, 0.0
    %163 = vadd.xlane.f32.xlu0 %v162
    %v164 = vpop.xlane.xlu0 %163
    %v165 = vsel %vm98, %v144, 0.0
    %166 = vadd.xlane.f32.xlu0 %v165
    %v167 = vpop.xlane.xlu0 %166
    %v168 = vsel %vm98, %v146, 0.0
    %169 = vadd.xlane.f32.xlu0 %v168
    %v170 = vpop.xlane.xlu0 %169
    %v171 = vlog2.pop %v149
    %v172 = vmul.f32 %v171, 0.6931472
    %v173 = vlog2.pop %v152
    %v174 = vmul.f32 %v173, 0.6931472
    %v175 = vlog2.pop %v155
    %v176 = vmul.f32 %v175, 0.6931472
    %v177 = vlog2.pop %v158
    %v178 = vmul.f32 %v177, 0.6931472
    %v179 = vlog2.pop %v161
    %v180 = vmul.f32 %v179, 0.6931472
    %v181 = vlog2.pop %v164
    %v182 = vmul.f32 %v181, 0.6931472
    %v183 = vlog2.pop %v167
    %v184 = vmul.f32 %v183, 0.6931472
    %v185 = vlog2.pop %v170
    %v186 = vmul.f32 %v185, 0.6931472
    %v187 = vlaneseq
    %v188 = vand.u32 %v187, 127
    %189 = vset.pattern.permute.xlu0 0
    %190 = vperm.xlu0 %189, %v90
    %v191 = vpop.permute.xlu0 %190
    %192 = vset.pattern.permute.xlu0 0
    %193 = vperm.xlu0 %192, %v91
    %v194 = vpop.permute.xlu0 %193
    %195 = vset.pattern.permute.xlu0 0
    %196 = vperm.xlu0 %195, %v92
    %v197 = vpop.permute.xlu0 %196
    %198 = vset.pattern.permute.xlu0 0
    %199 = vperm.xlu0 %198, %v93
    %v200 = vpop.permute.xlu0 %199
    %201 = vset.pattern.permute.xlu0 0
    %202 = vperm.xlu0 %201, %v94
    %v203 = vpop.permute.xlu0 %202
    %204 = vset.pattern.permute.xlu0 0
    %205 = vperm.xlu0 %204, %v95
    %v206 = vpop.permute.xlu0 %205
    %207 = vset.pattern.permute.xlu0 0
    %208 = vperm.xlu0 %207, %v96
    %v209 = vpop.permute.xlu0 %208
    %210 = vset.pattern.permute.xlu0 0
    %211 = vperm.xlu0 %210, %v97
    %v212 = vpop.permute.xlu0 %211
    %vm213 = vcmp.eq.s32.totalorder %v188, %v191
    %vm214 = vcmp.eq.s32.totalorder %v188, %v194
    %vm215 = vcmp.eq.s32.totalorder %v188, %v197
    %vm216 = vcmp.eq.s32.totalorder %v188, %v200
    %vm217 = vcmp.eq.s32.totalorder %v188, %v203
    %vm218 = vcmp.eq.s32.totalorder %v188, %v206
    %vm219 = vcmp.eq.s32.totalorder %v188, %v209
    %vm220 = vcmp.eq.s32.totalorder %v188, %v212
    %v221 = vsel %vm213, %v82, 0.0
    %v222 = vsel %vm214, %v83, 0.0
    %v223 = vsel %vm215, %v84, 0.0
    %v224 = vsel %vm216, %v85, 0.0
    %v225 = vsel %vm217, %v86, 0.0
    %v226 = vsel %vm218, %v87, 0.0
    %v227 = vsel %vm219, %v88, 0.0
    %v228 = vsel %vm220, %v89, 0.0
    %v229 = vsel %vm98, %v221, 0.0
    %230 = vadd.xlane.f32.xlu0 %v229
    %v231 = vpop.xlane.xlu0 %230
    %v232 = vsel %vm98, %v222, 0.0
    %233 = vadd.xlane.f32.xlu0 %v232
    %v234 = vpop.xlane.xlu0 %233
    %v235 = vsel %vm98, %v223, 0.0
    %236 = vadd.xlane.f32.xlu0 %v235
    %v237 = vpop.xlane.xlu0 %236
    %v238 = vsel %vm98, %v224, 0.0
    %239 = vadd.xlane.f32.xlu0 %v238
    %v240 = vpop.xlane.xlu0 %239
    %v241 = vsel %vm98, %v225, 0.0
    %242 = vadd.xlane.f32.xlu0 %v241
    %v243 = vpop.xlane.xlu0 %242
    %v244 = vsel %vm98, %v226, 0.0
    %245 = vadd.xlane.f32.xlu0 %v244
    %v246 = vpop.xlane.xlu0 %245
    %v247 = vsel %vm98, %v227, 0.0
    %248 = vadd.xlane.f32.xlu0 %v247
    %v249 = vpop.xlane.xlu0 %248
    %v250 = vsel %vm98, %v228, 0.0
    %251 = vadd.xlane.f32.xlu0 %v250
    %v252 = vpop.xlane.xlu0 %251
    %v253 = vsub.f32 %v231, %v101
    %v254 = vsub.f32 %v234, %v104
    %v255 = vsub.f32 %v237, %v107
    %v256 = vsub.f32 %v240, %v110
    %v257 = vsub.f32 %v243, %v113
    %v258 = vsub.f32 %v246, %v116
    %v259 = vsub.f32 %v249, %v119
    %v260 = vsub.f32 %v252, %v122
    %v261 = vsub.f32 %v253, %v172
    %v262 = vsub.f32 %v254, %v174
    %v263 = vsub.f32 %v255, %v176
    %v264 = vsub.f32 %v256, %v178
    %v265 = vsub.f32 %v257, %v180
    %v266 = vsub.f32 %v258, %v182
    %v267 = vsub.f32 %v259, %v184
    %v268 = vsub.f32 %v260, %v186
    %v269 = vmul.f32 %v261, 1.442695
    %v270 = vpow.pop %v269
    %v271 = vmul.f32 %v262, 1.442695
    %v272 = vpow.pop %v271
    %v273 = vmul.f32 %v263, 1.442695
    %v274 = vpow.pop %v273
    %v275 = vmul.f32 %v264, 1.442695
    %v276 = vpow.pop %v275
    %v277 = vmul.f32 %v265, 1.442695
    %v278 = vpow.pop %v277
    %v279 = vmul.f32 %v266, 1.442695
    %v280 = vpow.pop %v279
    %v281 = vmul.f32 %v267, 1.442695
    %v282 = vpow.pop %v281
    %v283 = vmul.f32 %v268, 1.442695
    %v284 = vpow.pop %v283
    %v285 = vsub.f32 1.0, %v270
    %v286 = vsub.f32 1.0, %v272
    %v287 = vsub.f32 1.0, %v274
    %v288 = vsub.f32 1.0, %v276
    %v289 = vsub.f32 1.0, %v278
    %v290 = vsub.f32 1.0, %v280
    %v291 = vsub.f32 1.0, %v282
    %v292 = vsub.f32 1.0, %v284
    %v293 = vmul.f32 %v285, %v285
    %v294 = vmul.f32 %v286, %v286
    %v295 = vmul.f32 %v287, %v287
    %v296 = vmul.f32 %v288, %v288
    %v297 = vmul.f32 %v289, %v289
    %v298 = vmul.f32 %v290, %v290
    %v299 = vmul.f32 %v291, %v291
    %v300 = vmul.f32 %v292, %v292
    %v301 = vmul.f32 %v293, %v261
    %v302 = vmul.f32 %v294, %v262
    %v303 = vmul.f32 %v295, %v263
    %v304 = vmul.f32 %v296, %v264
    %v305 = vmul.f32 %v297, %v265
    %v306 = vmul.f32 %v298, %v266
    %v307 = vmul.f32 %v299, %v267
    %v308 = vmul.f32 %v300, %v268
    %s309 = sadd.s32 0, 0
    %s310 = smul.u32 %s309, 64
    %v311 = vlaneseq
    %v312 = vshrl.u32 %v311, 7
    %v313 = vadd.s32 %v312, 8
    %v314 = vadd.s32 %v312, 16
    %v315 = vadd.s32 %v312, 24
    %v316 = vadd.s32 %v312, 32
    %v317 = vadd.s32 %v312, 40
    %v318 = vadd.s32 %v312, 48
    %v319 = vadd.s32 %v312, 56
    %v320 = vstv %s310
    %v321 = vadd.s32 %v320, %v312
    %v322 = vadd.s32 %v320, %v313
    %v323 = vadd.s32 %v320, %v314
    %v324 = vadd.s32 %v320, %v315
    %v325 = vadd.s32 %v320, %v316
    %v326 = vadd.s32 %v320, %v317
    %v327 = vadd.s32 %v320, %v318
    %v328 = vadd.s32 %v320, %v319
    %vm329 = vcmp.lt.s32.totalorder %v321, 64
    %vm330 = vcmp.lt.s32.totalorder %v322, 64
    %vm331 = vcmp.lt.s32.totalorder %v323, 64
    %vm332 = vcmp.lt.s32.totalorder %v324, 64
    %vm333 = vcmp.lt.s32.totalorder %v325, 64
    %vm334 = vcmp.lt.s32.totalorder %v326, 64
    %vm335 = vcmp.lt.s32.totalorder %v327, 64
    %vm336 = vcmp.lt.s32.totalorder %v328, 64
    %v337 = vsel %vm329, %v301, 0.0
    %v338 = vsel %vm330, %v302, 0.0
    %v339 = vsel %vm331, %v303, 0.0
    %v340 = vsel %vm332, %v304, 0.0
    %v341 = vsel %vm333, %v305, 0.0
    %v342 = vsel %vm334, %v306, 0.0
    %v343 = vsel %vm335, %v307, 0.0
    %v344 = vsel %vm336, %v308, 0.0
    %v345 = vld [vmem:[#allocation2] sm:$0x1]
    %vm346 = vcmask 7168
    %v347 = vsel %vm346, %v337, 0.0
    %v348 = vsel %vm346, %v338, 0.0
    %v349 = vadd.f32 %v347, %v348
    %v350 = vsel %vm346, %v339, 0.0
    %v351 = vadd.f32 %v349, %v350
    %v352 = vsel %vm346, %v340, 0.0
    %v353 = vadd.f32 %v351, %v352
    %v354 = vsel %vm346, %v341, 0.0
    %v355 = vadd.f32 %v353, %v354
    %v356 = vsel %vm346, %v342, 0.0
    %v357 = vadd.f32 %v355, %v356
    %v358 = vsel %vm346, %v343, 0.0
    %v359 = vadd.f32 %v357, %v358
    %v360 = vsel %vm346, %v344, 0.0
    %v361 = vadd.f32 %v359, %v360
    %362 = vadd.xlane.f32.xlu0 %v361
    %v363 = vpop.xlane.xlu0 %362
    %v364 = vrot.slane %v363, 4
    %v365 = vadd.f32 %v363, %v364
    %v366 = vrot.slane %v365, 2
    %v367 = vadd.f32 %v365, %v366
    %v368 = vrot.slane %v367, 1
    %v369 = vadd.f32 %v367, %v368
    %s370 = vtos %v369
    %v371 = vstv %s370
    %v372 = vadd.f32 %v345, %v371
    %vm373 = vcmask 0
    %374 = vst.msk [vmem:[#allocation2] sm:$0x1] %vm373, %v372
    // Predicated region
    $region14: #{tpu_custom_call.1} parent=1 // pred_check
      _
    $region15: #{tpu_custom_call.1} parent=1 // pred_check_branch
      %376 = sbr.rel (0) target = $region17
    $region16: #{tpu_custom_call.1} parent=1 // pred_region
      %s378 = ssub.s32 16, 16
      %379 = vsyncadd [#allocation3], %s378
      %s381 = sshll.u32 [#allocation2], 4
      %s382 = int_to_ptr.vmem [resolvable:$true] %s381
      %384 = dma.vmem_to_hbm [thread:$0]  %s382, 16, %s2, [#allocation3]
    $region17: #{tpu_custom_call.1} parent=1 // pred_fallthru
      _
    // Predicated region
    $region18: #{tpu_custom_call.1} parent=1 // pred_check
      _
    $region19: #{tpu_custom_call.1} parent=1 // pred_check_branch
      %386 = sbr.rel (0) target = $region21
    $region20: #{tpu_custom_call.1} parent=1 // pred_region
      %387 = dma.done [#allocation3], 16
    $region21: #{tpu_custom_call.1} parent=1 // pred_fallthru
      _
    %388 = vsyncpa [#allocation3], 1

</llo_original>
